<compile_context>
chip_gen: v7x
topology: tpu7x:2x2x1
jax: 0.10.0
libtpu: 0.0.40
codegen_flags: <defaults>
</compile_context>

<pallas_src>
import functools

import numpy as np
import jax
import jax.numpy as jnp
from jax.experimental import pallas as pl
from jax.experimental.pallas import tpu as pltpu


# ---------------------------------------------------------------------------
# Fused kernel
# ---------------------------------------------------------------------------
def _fused_attention_kernel(hw_scale, f_ref, w_ref, b_ref,
                            of_ref, alpha_ref, ctx_ref):
    # f_ref:     (Bt, C, HW)   channel-major feature tile (free view of NCHW)
    # w_ref:     (D, C)        linear weight, PyTorch layout
    # b_ref:     (D, 1)        bias
    # of_ref:    (Bt, HW, D)   linear output; D minor so (B*HW, D) is a free view
    # alpha_ref: (Bt, 1, HW)   attention weights, HW on lanes
    # ctx_ref:   (Bt, C, HW)   context, HW on lanes
    f = f_ref[...]
    bt = f.shape[0]

    # One batched MXU contraction over C for the whole Bt tile (replaces the old
    # per-image unrolled jnp.dot loop).  Pattern contracts lhs-minor with
    # rhs-second-minor, i.e. a plain per-batch matmul on the MXU.
    w_b = jnp.broadcast_to(w_ref[...], (bt,) + w_ref.shape)          # (Bt, D, C)
    of = jnp.einsum("bdc,bch->bdh", w_b, f,
                    preferred_element_type=jnp.float32,
                    precision=jax.lax.Precision.HIGHEST)             # (Bt, D, HW)
    of = of + b_ref[...]                                             # (D,1) bcast

    # Store out_f with D minor: the module's (B*HW, D) return is then a free
    # reshape in the wrapper -- no extra XLA transpose / HBM round trip.
    of_ref[...] = jnp.swapaxes(of, 1, 2)                             # (Bt, HW, D)

    # Softmax weights.  The subtracted per-image max cancels exactly in
    # alpha = rowsum / denom, so alpha/context are mathematically identical to
    # the module's global-max formulation (out_f is unaffected by the max).
    m = jnp.max(jnp.max(of, axis=2, keepdims=True), axis=1, keepdims=True)
    e = jnp.exp(of - m)                                              # (Bt, D, HW)
    s = jnp.sum(e, axis=1, keepdims=True)                            # (Bt, 1, HW)
    denom = jnp.sum(s, axis=2, keepdims=True)                        # (Bt, 1, 1)
    # Exact divide (the approx EUP reciprocal previously missed the tolerance).
    alpha = s / denom                                                # (Bt, 1, HW)
    alpha_ref[...] = alpha
    ctx_ref[...] = f * (hw_scale * alpha)                            # bcast over C


# ---------------------------------------------------------------------------
# VMEM accounting helpers (padded (8,128) shapes, generation aware caps)
# ---------------------------------------------------------------------------
def _round_up(n, m):
    return -(-n // m) * m


def _padded_vmem_bytes(shape, itemsize=4):
    """Bytes one f32 block actually occupies in VMEM (lane/sublane padding)."""
    s = list(shape)
    s[-1] = _round_up(s[-1], 128)
    if len(s) >= 2:
        s[-2] = _round_up(s[-2], 8)
    n = 1
    for d in s:
        n *= d
    return n * itemsize


def _vmem_caps():
    """Returns (vmem_limit cap, per-step block budget)."""
    kind = ""
    try:
        kind = jax.devices()[0].device_kind.lower()
    except Exception:
        pass
    if "v7" in kind:
        # v7x: 64 MiB physical VMEM per TensorCore -> leave Mosaic headroom.
        return 48 << 20, 4 << 20
    # v5e / v6e: 128 MiB VMEM -> larger cap and deeper per-step blocks.
    return 64 << 20, 8 << 20


# ---------------------------------------------------------------------------
# Wrapper
# ---------------------------------------------------------------------------
def attention_layer(features, W, b, *, block_budget_bytes=None):
    """features: (B, C, H, W) f32; W: (D, C) f32; b: (D,) f32."""
    B, C, H, Wd = features.shape
    HW = H * Wd
    D = W.shape[0]

    f_cm = features.reshape(B, C, HW)          # free view: channel-major kept
    b2 = b.reshape(D, 1)

    cap, budget = _vmem_caps()
    if block_budget_bytes is not None:
        budget = block_budget_bytes

    def per_step_bytes(bt):
        return (_padded_vmem_bytes((bt, C, HW)) +    # f block
                _padded_vmem_bytes((bt, HW, D)) +    # out_f block
                _padded_vmem_bytes((bt, 1, HW)) +    # alpha block
                _padded_vmem_bytes((bt, C, HW)))     # ctx block

    # Keep >= 2 grid steps so both v7x TensorCores get work under "parallel";
    # within that, pick the largest per-step batch tile fitting the budget.
    bt_cap = max(1, B // 2)
    bt = 1
    for cand in range(1, bt_cap + 1):
        if per_step_bytes(cand) <= budget:
            bt = cand
    grid = (pl.cdiv(B, bt),)   # partial last block is masked by Pallas

    # Explicit VMEM request: double-buffered blocks + (re-fetched) weights, all
    # at padded VMEM shapes, plus slack for Mosaic internal scratch.
    weight_bytes = _padded_vmem_bytes((D, C)) + _padded_vmem_bytes((D, 1))
    vmem_limit = int(min(cap, max(8 << 20,
                                  2 * per_step_bytes(bt)
                                  + 2 * weight_bytes + (2 << 20))))

    out_f_bhd, alpha_b1h, ctx_cm = pl.pallas_call(
        functools.partial(_fused_attention_kernel, float(HW)),
        out_shape=(
            jax.ShapeDtypeStruct((B, HW, D), jnp.float32),
            jax.ShapeDtypeStruct((B, 1, HW), jnp.float32),
            jax.ShapeDtypeStruct((B, C, HW), jnp.float32),
        ),
        grid=grid,
        in_specs=[
            pl.BlockSpec((bt, C, HW), lambda g: (g, 0, 0)),
            pl.BlockSpec((D, C), lambda g: (0, 0)),
            pl.BlockSpec((D, 1), lambda g: (0, 0)),
        ],
        out_specs=(
            pl.BlockSpec((bt, HW, D), lambda g: (g, 0, 0)),
            pl.BlockSpec((bt, 1, HW), lambda g: (g, 0, 0)),
            pl.BlockSpec((bt, C, HW), lambda g: (g, 0, 0)),
        ),
        compiler_params=pltpu.CompilerParams(
            dimension_semantics=("parallel",),   # no cross-step accumulator
            vmem_limit_bytes=vmem_limit,
        ),
    )(f_cm, W, b2)

    # Return-convention glue: everything below is a free contiguous view, no
    # extra HBM pass for features, context, out_f or alpha.
    context = ctx_cm.reshape(B, C, H, Wd)
    out_f_flat = out_f_bhd.reshape(B * HW, D)
    alpha_f = alpha_b1h.reshape(B * HW)
    return context, out_f_flat, alpha_f


# ---------------------------------------------------------------------------
# Pure-JAX reference (mirrors the PyTorch forward exactly, incl. global max)
# ---------------------------------------------------------------------------
def attention_layer_ref(features, W, b):
    B, C, H, Wd = features.shape
    HW = H * Wd
    f_rp = jnp.transpose(features.reshape(B, C, HW), (0, 2, 1))        # (B, HW, C)
    out_f = jnp.einsum("btc,dc->btd", f_rp, W,
                       precision=jax.lax.Precision.HIGHEST) + b        # (B, HW, D)
    out_max = out_f.max()
    e = jnp.exp(out_f - out_max)
    s = e.sum(axis=2)                                                  # (B, HW)
    alpha = s / s.sum(axis=1, keepdims=True)                           # (B, HW)
    context = features * (HW * alpha.reshape(B, 1, H, Wd))
    return context, out_f.reshape(B * HW, -1), alpha.reshape(-1)


if __name__ == "__main__":
    key = jax.random.PRNGKey(0)
    k_f, k_w, k_b = jax.random.split(key, 3)

    B, C, H, Wd = 2, 8, 8, 8      # small shapes consistent with the module
    D = 16                        # output dim of the linear layer

    features = jax.random.normal(k_f, (B, C, H, Wd), dtype=jnp.float32)
    W = 0.1 * jax.random.normal(k_w, (D, C), dtype=jnp.float32)
    b = 0.1 * jax.random.normal(k_b, (D,), dtype=jnp.float32)

    ctx, out_f_flat, alpha_f = attention_layer(features, W, b)
    jax.block_until_ready((ctx, out_f_flat, alpha_f))

    ctx_r, out_f_r, alpha_r = attention_layer_ref(features, W, b)
    # out_f is the plain linear result -> tight tolerance.
    np.testing.assert_allclose(np.asarray(out_f_flat), np.asarray(out_f_r),
                               rtol=1e-5, atol=1e-5)
    # alpha/context: exact divide + per-image max (cancels exactly) -> only
    # rounding-level differences remain.
    np.testing.assert_allclose(np.asarray(alpha_f), np.asarray(alpha_r),
                               rtol=1e-3, atol=1e-6)
    np.testing.assert_allclose(np.asarray(ctx), np.asarray(ctx_r),
                               rtol=1e-3, atol=1e-5)

    print("KERNEL_OK")
</pallas_src>

<mosaic_0001>
module attributes {stable_mosaic.version = 11 : i64} {
  func.func @_fused_attention_kernel(%arg0: i32, %arg1: memref<1x8x64xf32, #tpu.memory_space<vmem>>, %arg2: memref<16x8xf32, #tpu.memory_space<vmem>>, %arg3: memref<16x1xf32, #tpu.memory_space<vmem>>, %arg4: memref<1x64x16xf32, #tpu.memory_space<vmem>>, %arg5: memref<1x1x64xf32, #tpu.memory_space<vmem>>, %arg6: memref<1x8x64xf32, #tpu.memory_space<vmem>>) attributes {dimension_semantics = [#tpu.dimension_semantics<parallel>], iteration_bounds = array<i64: 2>, scalar_prefetch = 0 : i64, scratch_operands = 0 : i64, tpu.core_type = #tpu.core_type<tc>, window_params = [{transform_indices = @transform_0, window_bounds = array<i64: 1, 8, 64>}, {pipeline_mode = #tpu.pipeline_mode<synchronous>, transform_indices = @transform_1, window_bounds = array<i64: 16, 8>}, {pipeline_mode = #tpu.pipeline_mode<synchronous>, transform_indices = @transform_2, window_bounds = array<i64: 16, 1>}, {transform_indices = @transform_3, window_bounds = array<i64: 1, 64, 16>}, {transform_indices = @transform_4, window_bounds = array<i64: 1, 1, 64>}, {transform_indices = @transform_5, window_bounds = array<i64: 1, 8, 64>}]} {
    %c0 = arith.constant 0 : index
    %c0_0 = arith.constant 0 : index
    %c0_1 = arith.constant 0 : index
    %0 = vector.load %arg1[%c0, %c0_0, %c0_1] : memref<1x8x64xf32, #tpu.memory_space<vmem>>, vector<1x8x64xf32>
    %c0_2 = arith.constant 0 : index
    %c0_3 = arith.constant 0 : index
    %1 = vector.load %arg2[%c0_2, %c0_3] : memref<16x8xf32, #tpu.memory_space<vmem>>, vector<16x8xf32>
    %2 = vector.shape_cast %1 : vector<16x8xf32> to vector<1x16x8xf32>
    "tpu.trace_start"() <{level = 10 : i32, message = "bdc,bch->bdh"}> : () -> ()
    %cst = arith.constant dense<0.000000e+00> : vector<1x16x64xf32>
    %3 = tpu.matmul %2, %0, %cst {dimension_numbers = #tpu.dot_dimension_numbers<[2], [1], [1], [2], [0, 0, 0, 1, 1, 2], [0], [0]>, precision = #tpu.contract_precision<fp32>} : vector<1x16x8xf32>, vector<1x8x64xf32>, vector<1x16x64xf32> -> vector<1x16x64xf32>
    "tpu.trace_stop"() : () -> ()
    %c0_4 = arith.constant 0 : index
    %c0_5 = arith.constant 0 : index
    %4 = vector.load %arg3[%c0_4, %c0_5] : memref<16x1xf32, #tpu.memory_space<vmem>>, vector<16x1xf32>
    %5 = vector.shape_cast %4 : vector<16x1xf32> to vector<1x16x1xf32>
    %6 = vector.broadcast %5 : vector<1x16x1xf32> to vector<1x16x64xf32>
    %7 = arith.addf %3, %6 : vector<1x16x64xf32>
    %8 = tpu.transpose %7, [0, 2, 1] : vector<1x16x64xf32> -> vector<1x64x16xf32>
    %c0_6 = arith.constant 0 : index
    %c0_7 = arith.constant 0 : index
    %c0_8 = arith.constant 0 : index
    %9 = vector.load %arg4[%c0_6, %c0_7, %c0_8] : memref<1x64x16xf32, #tpu.memory_space<vmem>>, vector<1x64x16xf32>
    tpu.vector_store %arg4[%c0_6, %c0_7, %c0_8], %8 {strides = array<i32>} : memref<1x64x16xf32, #tpu.memory_space<vmem>>, vector<1x64x16xf32>,
    %cst_9 = arith.constant dense<0xFF800000> : vector<1x16xf32>
    %10 = vector.multi_reduction <maximumf>, %7, %cst_9 [2] : vector<1x16x64xf32> to vector<1x16xf32>
    %11 = vector.shape_cast %10 : vector<1x16xf32> to vector<1x16x1xf32>
    %cst_10 = arith.constant dense<0xFF800000> : vector<1x1xf32>
    %12 = vector.multi_reduction <maximumf>, %11, %cst_10 [1] : vector<1x16x1xf32> to vector<1x1xf32>
    %13 = vector.shape_cast %12 : vector<1x1xf32> to vector<1x1x1xf32>
    %14 = vector.broadcast %13 : vector<1x1x1xf32> to vector<1x16x64xf32>
    %15 = arith.subf %7, %14 : vector<1x16x64xf32>
    %16 = math.exp %15 : vector<1x16x64xf32>
    %cst_11 = arith.constant dense<0.000000e+00> : vector<1x64xf32>
    %17 = vector.multi_reduction <add>, %16, %cst_11 [1] : vector<1x16x64xf32> to vector<1x64xf32>
    %18 = vector.shape_cast %17 : vector<1x64xf32> to vector<1x1x64xf32>
    %cst_12 = arith.constant dense<0.000000e+00> : vector<1x1xf32>
    %19 = vector.multi_reduction <add>, %18, %cst_12 [2] : vector<1x1x64xf32> to vector<1x1xf32>
    %20 = vector.shape_cast %19 : vector<1x1xf32> to vector<1x1x1xf32>
    %21 = vector.broadcast %20 : vector<1x1x1xf32> to vector<1x1x64xf32>
    %22 = arith.divf %18, %21 : vector<1x1x64xf32>
    %c0_13 = arith.constant 0 : index
    %c0_14 = arith.constant 0 : index
    %c0_15 = arith.constant 0 : index
    %23 = vector.load %arg5[%c0_13, %c0_14, %c0_15] : memref<1x1x64xf32, #tpu.memory_space<vmem>>, vector<1x1x64xf32>
    tpu.vector_store %arg5[%c0_13, %c0_14, %c0_15], %22 {strides = array<i32>} : memref<1x1x64xf32, #tpu.memory_space<vmem>>, vector<1x1x64xf32>,
    %cst_16 = arith.constant 6.400000e+01 : f32
    %24 = vector.broadcast %cst_16 : f32 to vector<1x1x64xf32>
    %25 = arith.mulf %24, %22 : vector<1x1x64xf32>
    %26 = vector.broadcast %25 : vector<1x1x64xf32> to vector<1x8x64xf32>
    %27 = arith.mulf %0, %26 : vector<1x8x64xf32>
    %c0_17 = arith.constant 0 : index
    %c0_18 = arith.constant 0 : index
    %c0_19 = arith.constant 0 : index
    %28 = vector.load %arg6[%c0_17, %c0_18, %c0_19] : memref<1x8x64xf32, #tpu.memory_space<vmem>>, vector<1x8x64xf32>
    tpu.vector_store %arg6[%c0_17, %c0_18, %c0_19], %27 {strides = array<i32>} : memref<1x8x64xf32, #tpu.memory_space<vmem>>, vector<1x8x64xf32>,
    return
  }
  func.func @transform_0(%arg0: i32) -> (i32, i32, i32) {
    %c0_i32 = arith.constant 0 : i32
    %c0_i32_0 = arith.constant 0 : i32
    %c0_i32_1 = arith.constant 0 : i32
    return %arg0, %c0_i32, %c0_i32_0 : i32, i32, i32
  }
  func.func @transform_1(%arg0: i32) -> (i32, i32) {
    %c0_i32 = arith.constant 0 : i32
    %c0_i32_0 = arith.constant 0 : i32
    %c0_i32_1 = arith.constant 0 : i32
    return %c0_i32, %c0_i32_0 : i32, i32
  }
  func.func @transform_2(%arg0: i32) -> (i32, i32) {
    %c0_i32 = arith.constant 0 : i32
    %c0_i32_0 = arith.constant 0 : i32
    %c0_i32_1 = arith.constant 0 : i32
    return %c0_i32, %c0_i32_0 : i32, i32
  }
  func.func @transform_3(%arg0: i32) -> (i32, i32, i32) {
    %c0_i32 = arith.constant 0 : i32
    %c0_i32_0 = arith.constant 0 : i32
    %c0_i32_1 = arith.constant 0 : i32
    return %arg0, %c0_i32, %c0_i32_0 : i32, i32, i32
  }
  func.func @transform_4(%arg0: i32) -> (i32, i32, i32) {
    %c0_i32 = arith.constant 0 : i32
    %c0_i32_0 = arith.constant 0 : i32
    %c0_i32_1 = arith.constant 0 : i32
    return %arg0, %c0_i32, %c0_i32_0 : i32, i32, i32
  }
  func.func @transform_5(%arg0: i32) -> (i32, i32, i32) {
    %c0_i32 = arith.constant 0 : i32
    %c0_i32_0 = arith.constant 0 : i32
    %c0_i32_1 = arith.constant 0 : i32
    return %arg0, %c0_i32, %c0_i32_0 : i32, i32, i32
  }
}

</mosaic_0001>

<llo_original>
// kernel: tpu_custom_call.1
$region0: #{tpu_custom_call.1}
  #allocation0 [shape = 'u32[]', space=smem, size = 0x4, offset = 0x4, fixed_abs, tag = 'smem constant byte address 0x4 - core index']
  #allocation1 [shape = 'u32[144,128]{1,0:T(1,128)}', space=vmem, size = 0x12000, scoped, tag = 'internal scratch']
  %s0 = inlined_call_operand.vmem [shape: f32[2,8,64], index: 0, kind: input, shape index: {}]
  %s1 = inlined_call_operand.vmem [shape: f32[16,8], index: 1, kind: input, shape index: {}]
  %s2 = inlined_call_operand.vmem [shape: f32[16,1], index: 2, kind: input, shape index: {}]
  %s3 = inlined_call_operand.vmem [shape: f32[2,64,16], index: 3, kind: output, shape index: {0}]
  %s4 = inlined_call_operand.hbm [shape: f32[2,1,64], index: 4, kind: output, shape index: {1}]
  %s5 = inlined_call_operand.hbm [shape: f32[2,8,64], index: 5, kind: output, shape index: {2}]
  %6 = xla_tuple %s3, %s4, %s5
  %s7 = sld [smem:[#allocation0]]
  $region61: #{tpu_custom_call.1} parent=0
    _
  %s9 = ssub.s32 1, %s7
  %s10 = scalar_select 0, %s9, %s7
  $region1: #{tpu_custom_call.1} parent=0
    #allocation2 [shape = 'u8[1024]{0}', space=vmem, size = 0x400, scoped, tag = 'output window, operand 1']
    #allocation3 [shape = 's32[2]{0}', space=sflag, size = 0x8, scoped, tag = 'scoped memory for tpu_custom_call.1']
    #allocation4 [shape = 'u8[8192]{0}', space=vmem, size = 0x2000, scoped, tag = 'output window, operand 2']
    #allocation5 [shape = 's32[2]{0}', space=sflag, size = 0x8, scoped, tag = 'scoped memory for tpu_custom_call.1']
    %11 = vsyncpa [#allocation3], 0
    %s12 = scalar_lea.sflag [#allocation3], 1
    %13 = vsyncpa %s12, 0
    %14 = vsyncpa [#allocation5], 0
    %s15 = scalar_lea.sflag [#allocation5], 1
    %16 = vsyncpa %s15, 0
    loop: start=0, step=1, limit=4
    $region2: #{tpu_custom_call.1} parent=1 // loop_pre_header
      _
    $region3: #{tpu_custom_call.1} parent=1 // loop_header
      %s18 = sphi 0, %s22
      %p19 = scmp.ge.s32.totalorder %s18, 4
      %s28 = sphi 0, %s30
      %s31 = sphi 0, %s28
      %s32 = sphi 0, %s31
      %s48 = sphi 0, %s32
      %s52 = sphi 0, %s52
      %s54 = sphi 0, %s52
      %s55 = sphi 0, %s54
      %s69 = sphi 0, %s55
      %s73 = sphi 0, %s73
      %s75 = sphi 0, %s73
      %s76 = sphi 0, %s75
      %s90 = sphi 0, %s76
      %s96 = sphi 0, %s98
      %s99 = sphi 0, %s96
      %s100 = sphi 0, %s99
      %s116 = sphi 0, %s100
      %s122 = sphi 0, %s124
      %s125 = sphi 0, %s122
      %s126 = sphi 0, %s125
      %s142 = sphi 0, %s126
      %s148 = sphi 0, %s150
      %s151 = sphi 0, %s148
      %s152 = sphi 0, %s151
      %s168 = sphi 0, %s152
    $region4: #{tpu_custom_call.1} parent=1 // loop_header_branch
      %21 = sbr.rel (%p19) target = $region8
    $region5: #{tpu_custom_call.1} parent=1 // loop_body
      %s23 = ssub.s32 %s18, 1
      %s24 = ssub.s32 %s18, 2
      %s25 = sadd.s32 %s18, 1
      %s26 = ssub.s32 %s18, %s25
      %p27 = scmp.eq.s32.totalorder %s26, 0
      %s29 = sadd.s32 %s28, 1
      %s30 = scalar_select %p27, %s28, %s29
      %p33 = pneg %p27
      %p34 = scmp.eq.s32.totalorder %s18, 1
      %p35 = por %p33, %p34
      %p36 = scmp.ne.s32.totalorder %s28, %s31
      %p37 = scmp.eq.s32.totalorder %s18, 0
      %p38 = por %p36, %p37
      %p39 = scmp.ne.s32.totalorder %s28, %s31
      %p40 = scmp.eq.s32.totalorder %s23, 1
      %p41 = por %p39, %p40
      %p42 = scmp.ne.s32.totalorder %s31, %s32
      %p43 = scmp.eq.s32.totalorder %s23, 0
      %p44 = por %p42, %p43
      %p45 = scmp.ne.s32.totalorder %s31, %s32
      %p46 = scmp.eq.s32.totalorder %s24, 1
      %p47 = por %p45, %p46
      %p49 = scmp.ne.s32.totalorder %s32, %s48
      %p50 = scmp.eq.s32.totalorder %s24, 0
      %p51 = por %p49, %p50
      %s53 = sadd.s32 %s52, 1
      %p56 = scmp.eq.s32.totalorder %s18, 1
      %p57 = scmp.ne.s32.totalorder %s52, %s54
      %p58 = scmp.eq.s32.totalorder %s18, 0
      %p59 = por %p57, %p58
      %p60 = scmp.ne.s32.totalorder %s52, %s54
      %p61 = scmp.eq.s32.totalorder %s23, 1
      %p62 = por %p60, %p61
      %p63 = scmp.ne.s32.totalorder %s54, %s55
      %p64 = scmp.eq.s32.totalorder %s23, 0
      %p65 = por %p63, %p64
      %p66 = scmp.ne.s32.totalorder %s54, %s55
      %p67 = scmp.eq.s32.totalorder %s24, 1
      %p68 = por %p66, %p67
      %p70 = scmp.ne.s32.totalorder %s55, %s69
      %p71 = scmp.eq.s32.totalorder %s24, 0
      %p72 = por %p70, %p71
      %s74 = sadd.s32 %s73, 1
      %p77 = scmp.eq.s32.totalorder %s18, 1
      %p78 = scmp.ne.s32.totalorder %s73, %s75
      %p79 = scmp.eq.s32.totalorder %s18, 0
      %p80 = por %p78, %p79
      %p81 = scmp.ne.s32.totalorder %s73, %s75
      %p82 = scmp.eq.s32.totalorder %s23, 1
      %p83 = por %p81, %p82
      %p84 = scmp.ne.s32.totalorder %s75, %s76
      %p85 = scmp.eq.s32.totalorder %s23, 0
      %p86 = por %p84, %p85
      %p87 = scmp.ne.s32.totalorder %s75, %s76
      %p88 = scmp.eq.s32.totalorder %s24, 1
      %p89 = por %p87, %p88
      %p91 = scmp.ne.s32.totalorder %s76, %s90
      %p92 = scmp.eq.s32.totalorder %s24, 0
      %p93 = por %p91, %p92
      %s94 = ssub.s32 %s18, %s25
      %p95 = scmp.eq.s32.totalorder %s94, 0
      %s97 = sadd.s32 %s96, 1
      %s98 = scalar_select %p95, %s96, %s97
      %p101 = pneg %p95
      %p102 = scmp.eq.s32.totalorder %s18, 1
      %p103 = por %p101, %p102
      %p104 = scmp.ne.s32.totalorder %s96, %s99
      %p105 = scmp.eq.s32.totalorder %s18, 0
      %p106 = por %p104, %p105
      %p107 = scmp.ne.s32.totalorder %s96, %s99
      %p108 = scmp.eq.s32.totalorder %s23, 1
      %p109 = por %p107, %p108
      %p110 = scmp.ne.s32.totalorder %s99, %s100
      %p111 = scmp.eq.s32.totalorder %s23, 0
      %p112 = por %p110, %p111
      %p113 = scmp.ne.s32.totalorder %s99, %s100
      %p114 = scmp.eq.s32.totalorder %s24, 1
      %p115 = por %p113, %p114
      %p117 = scmp.ne.s32.totalorder %s100, %s116
      %p118 = scmp.eq.s32.totalorder %s24, 0
      %p119 = por %p117, %p118
      %s120 = ssub.s32 %s18, %s25
      %p121 = scmp.eq.s32.totalorder %s120, 0
      %s123 = sadd.s32 %s122, 1
      %s124 = scalar_select %p121, %s122, %s123
      %p127 = pneg %p121
      %p128 = scmp.eq.s32.totalorder %s18, 1
      %p129 = por %p127, %p128
      %p130 = scmp.ne.s32.totalorder %s122, %s125
      %p131 = scmp.eq.s32.totalorder %s18, 0
      %p132 = por %p130, %p131
      %p133 = scmp.ne.s32.totalorder %s122, %s125
      %p134 = scmp.eq.s32.totalorder %s23, 1
      %p135 = por %p133, %p134
      %p136 = scmp.ne.s32.totalorder %s125, %s126
      %p137 = scmp.eq.s32.totalorder %s23, 0
      %p138 = por %p136, %p137
      %p139 = scmp.ne.s32.totalorder %s125, %s126
      %p140 = scmp.eq.s32.totalorder %s24, 1
      %p141 = por %p139, %p140
      %p143 = scmp.ne.s32.totalorder %s126, %s142
      %p144 = scmp.eq.s32.totalorder %s24, 0
      %p145 = por %p143, %p144
      %s146 = ssub.s32 %s18, %s25
      %p147 = scmp.eq.s32.totalorder %s146, 0
      %s149 = sadd.s32 %s148, 1
      %s150 = scalar_select %p147, %s148, %s149
      %p153 = pneg %p147
      %p154 = scmp.eq.s32.totalorder %s18, 1
      %p155 = por %p153, %p154
      %p156 = scmp.ne.s32.totalorder %s148, %s151
      %p157 = scmp.eq.s32.totalorder %s18, 0
      %p158 = por %p156, %p157
      %p159 = scmp.ne.s32.totalorder %s148, %s151
      %p160 = scmp.eq.s32.totalorder %s23, 1
      %p161 = por %p159, %p160
      %p162 = scmp.ne.s32.totalorder %s151, %s152
      %p163 = scmp.eq.s32.totalorder %s23, 0
      %p164 = por %p162, %p163
      %p165 = scmp.ne.s32.totalorder %s151, %s152
      %p166 = scmp.eq.s32.totalorder %s24, 1
      %p167 = por %p165, %p166
      %p169 = scmp.ne.s32.totalorder %s152, %s168
      %p170 = scmp.eq.s32.totalorder %s24, 0
      %p171 = por %p169, %p170
      %p172 = scmp.le.s32.totalorder 1, %s18
      %p173 = scmp.lt.s32.totalorder %s18, 3
      %p174 = pnand %p172, %p173
      %p175 = pneg %p174
      // Predicated region
      $region9: #{tpu_custom_call.1} parent=5 // pred_check
        _
      $region10: #{tpu_custom_call.1} parent=5 // pred_check_branch
        %177 = sbr.rel (%p174) target = $region12
      $region11: #{tpu_custom_call.1} parent=5 // pred_region
        %s178 = ssub.s32 %s18, 1
        // Predicated region
        $region13: #{tpu_custom_call.1} parent=11 // pred_check
          %p179 = pneg %p65
        $region14: #{tpu_custom_call.1} parent=11 // pred_check_branch
          %181 = sbr.rel (%p179) target = $region16
        $region15: #{tpu_custom_call.1} parent=11 // pred_region
          _
        $region16: #{tpu_custom_call.1} parent=11 // pred_fallthru
          _
        // Predicated region
        $region17: #{tpu_custom_call.1} parent=11 // pred_check
          %p182 = pneg %p86
        $region18: #{tpu_custom_call.1} parent=11 // pred_check_branch
          %184 = sbr.rel (%p182) target = $region20
        $region19: #{tpu_custom_call.1} parent=11 // pred_region
          _
        $region20: #{tpu_custom_call.1} parent=11 // pred_fallthru
          _
      $region12: #{tpu_custom_call.1} parent=5 // pred_fallthru
        _
      %p185 = scmp.lt.s32.totalorder %s18, 2
      // Predicated region
      $region21: #{tpu_custom_call.1} parent=5 // pred_check
        %p186 = pneg %p185
      $region22: #{tpu_custom_call.1} parent=5 // pred_check_branch
        %188 = sbr.rel (%p186) target = $region24
      $region23: #{tpu_custom_call.1} parent=5 // pred_region
        // Predicated region
        $region25: #{tpu_custom_call.1} parent=23 // pred_check
          %p189 = pneg %p38
        $region26: #{tpu_custom_call.1} parent=23 // pred_check_branch
          %191 = sbr.rel (%p189) target = $region28
        $region27: #{tpu_custom_call.1} parent=23 // pred_region
          %p192 = scmp.lt.s32.totalorder %s18, 1
          %s193 = scalar_select %p192, %s18, 1
          %s194 = smul.addr %s193, 8
          %s195 = scalar_lea.vmem %s0, %s194
        $region28: #{tpu_custom_call.1} parent=23 // pred_fallthru
          _
      $region24: #{tpu_custom_call.1} parent=5 // pred_fallthru
        _
      %p196 = scmp.le.s32.totalorder 1, %s18
      %p197 = scmp.lt.s32.totalorder %s18, 3
      %p198 = pnand %p196, %p197
      %p199 = pneg %p198
      // Predicated region
      $region29: #{tpu_custom_call.1} parent=5 // pred_check
        _
      $region30: #{tpu_custom_call.1} parent=5 // pred_check_branch
        %201 = sbr.rel (%p198) target = $region32
      $region31: #{tpu_custom_call.1} parent=5 // pred_region
        %s202 = ssub.s32 %s18, 1
        %p203 = scmp.lt.s32.totalorder %s23, 1
        %s204 = scalar_select %p203, %s23, 1
        %s205 = smul.addr %s204, 8
        %s206 = scalar_lea.vmem %s0, %s205
        %p207 = pneg %p44
        %p208 = pneg %p41
        %p209 = pneg %p65
        %p210 = pneg %p62
        %p211 = pneg %p86
        %p212 = pneg %p83
        %p213 = pneg %p112
        %p214 = pneg %p109
        %p215 = scmp.lt.s32.totalorder %s23, 1
        %s216 = scalar_select %p215, %s23, 1
        %s217 = smul.addr %s216, 8
        %s218 = smul.addr %s217, 8
        %s219 = scalar_lea.vmem %s3, %s218
        %p220 = pneg %p138
        %p221 = pneg %p135
        %s222 = sand.u32 %s125, 1
        %s223 = scalar_lea.sflag [#allocation3], %s222
        %s224 = sand.u32 %s125, 1
        %s225 = scalar_lea.vmem [#allocation2], %s224
        %p226 = pneg %p164
        %p227 = pneg %p161
        %s228 = sand.u32 %s151, 1
        %s229 = scalar_lea.sflag [#allocation5], %s228
        %s230 = sand.u32 %s151, 1
        %s231 = smul.addr %s230, 8
        %s232 = scalar_lea.vmem [#allocation4], %s231
        %p233 = scmp.lt.s32.totalorder %s23, 1
        %s234 = scalar_select %p233, %s23, 1
        %s235 = smul.addr %s234, 8
        %s236 = scalar_lea.vmem %s0, %s235
        %p237 = scmp.lt.s32.totalorder %s23, 1
        %s238 = scalar_select %p237, %s23, 1
        %s239 = smul.addr %s238, 8
        %s240 = smul.addr %s239, 8
        %s241 = scalar_lea.vmem %s3, %s240
        %v242 = vld [vmem:[%s236] sm:$0xff]
        %v243 = vld [vmem:[%s1] sm:$0xff]
        %v244 = vld [vmem:[%s1 + $0x8] sm:$0xff]
        %v245 = vld [vmem:[%s2] sm:$0xff]
        %v246 = vld [vmem:[%s2 + $0x8] sm:$0xff]
        %248 = vset.pattern.permute.xlu0 0
        %249 = vperm.xlu0 %248, %v245
        %v250 = vpop.permute.xlu0 %249
        %253 = vset.pattern.permute.xlu0 0
        %254 = vperm.xlu0 %253, %v246
        %v255 = vpop.permute.xlu0 %254
        %vm257 = vcmask 64512
        %v259 = vsel %vm257, %v243, 0
        %v262 = vsel %vm257, %v244, 0
        %264 = vmatprep.subr.mxu0 0.0
        %v265 = vand.u32 %v242, 4294901760
        %266 = vmatpush1.msra.mxu0 %v265
        %267 = vmatprep.subr.mxu0 0.0
        %268 = vmatpush1.msra.mxu0 0.0
        %269 = vmatprep.subr.mxu0 0.0
        %270 = vmatpush1.msra.mxu0 0.0
        %271 = vmatprep.subr.mxu0 0.0
        %272 = vmatpush1.msra.mxu0 0.0
        %273 = vmatprep.subr.mxu0 0.0
        %274 = vmatpush1.msra.mxu0 0.0
        %275 = vmatprep.subr.mxu0 0.0
        %276 = vmatpush1.msra.mxu0 0.0
        %277 = vmatprep.subr.mxu0 0.0
        %278 = vmatpush1.msra.mxu0 0.0
        %279 = vmatprep.subr.mxu0 0.0
        %280 = vmatpush1.msra.mxu0 0.0
        %281 = vmatprep.subr.mxu0 0.0
        %282 = vmatpush1.msra.mxu0 0.0
        %283 = vmatprep.subr.mxu0 0.0
        %284 = vmatpush1.msra.mxu0 0.0
        %285 = vmatprep.subr.mxu0 0.0
        %286 = vmatpush1.msra.mxu0 0.0
        %287 = vmatprep.subr.mxu0 0.0
        %288 = vmatpush1.msra.mxu0 0.0
        %289 = vmatprep.subr.mxu0 0.0
        %290 = vmatpush1.msra.mxu0 0.0
        %291 = vmatprep.subr.mxu0 0.0
        %292 = vmatpush1.msra.mxu0 0.0
        %293 = vmatprep.subr.mxu0 0.0
        %294 = vmatpush1.msra.mxu0 0.0
        %295 = vmatprep.subr.mxu0 0.0
        %296 = vmatpush1.msra.mxu0 0.0
        %297 = vmatprep.subr.mxu0 0.0
        %298 = vmatpush1.msra.mxu0 0.0
        %299 = vmatprep.subr.mxu0 0.0
        %300 = vmatpush1.msra.mxu0 0.0
        %301 = vmatprep.subr.mxu0 0.0
        %302 = vmatpush1.msra.mxu0 0.0
        %303 = vmatprep.subr.mxu0 0.0
        %304 = vmatpush1.msra.mxu0 0.0
        %305 = vmatprep.subr.mxu0 0.0
        %306 = vmatpush1.msra.mxu0 0.0
        %307 = vmatprep.subr.mxu0 0.0
        %308 = vmatpush1.msra.mxu0 0.0
        %309 = vmatprep.subr.mxu0 0.0
        %310 = vmatpush1.msra.mxu0 0.0
        %311 = vmatprep.subr.mxu0 0.0
        %312 = vmatpush1.msra.mxu0 0.0
        %313 = vmatprep.subr.mxu0 0.0
        %314 = vmatpush1.msra.mxu0 0.0
        %315 = vmatprep.subr.mxu0 0.0
        %316 = vmatpush1.msra.mxu0 0.0
        %317 = vmatprep.subr.mxu0 0.0
        %318 = vmatpush1.msra.mxu0 0.0
        %319 = vmatprep.subr.mxu0 0.0
        %320 = vmatpush1.msra.mxu0 0.0
        %321 = vmatprep.subr.mxu0 0.0
        %322 = vmatpush1.msra.mxu0 0.0
        %323 = vmatprep.subr.mxu0 0.0
        %324 = vmatpush1.msra.mxu0 0.0
        %325 = vmatprep.subr.mxu0 0.0
        %326 = vmatpush1.msra.mxu0 0.0
        %327 = vmatprep.subr.mxu0 0.0
        %328 = vmatpush1.msra.mxu0 0.0
        %329 = vmatprep.mubr.f32.mxu0 0.0
        %v330 = vand.u32 %v259, 4294901760
        %v331 = vsub.f32 %v259, %v330
        %v332 = vand.u32 %v331, 4294901760
        %v333 = vsub.f32 %v331, %v332
        %v334 = vand.u32 %v333, 4294901760
        %335 = vmatmul.mubr.f32.gmra.mrb[0].mxu0 %v334
        %v336 = vpop.f32.mrb[0].mxu0
        %v337 = vadd.f32 %v250, %v336
        %v338 = vpop.f32.mrb[0].mxu0
        %339 = vmatprep.mubr.f32.mxu0 0.0
        %v340 = vand.u32 %v262, 4294901760
        %v341 = vsub.f32 %v262, %v340
        %v342 = vand.u32 %v341, 4294901760
        %v343 = vsub.f32 %v341, %v342
        %v344 = vand.u32 %v343, 4294901760
        %345 = vmatmul.mubr.f32.gmra.mrb[0].mxu0 %v344
        %v346 = vpop.f32.mrb[0].mxu0
        %v347 = vadd.f32 %v255, %v346
        %v348 = vpop.f32.mrb[0].mxu0
        %349 = vdwg.mxu0
        %350 = vmatprep.subr.mxu0 0.0
        %v351 = vand.u32 %v242, 4294901760
        %v352 = vsub.f32 %v242, %v351
        %v353 = vand.u32 %v352, 4294901760
        %v354 = vsub.f32 %v352, %v353
        %v355 = vand.u32 %v354, 4294901760
        %356 = vmatpush1.msra.mxu0 %v355
        %357 = vmatprep.subr.mxu0 0.0
        %358 = vmatpush1.msra.mxu0 0.0
        %359 = vmatprep.subr.mxu0 0.0
        %360 = vmatpush1.msra.mxu0 0.0
        %361 = vmatprep.subr.mxu0 0.0
        %362 = vmatpush1.msra.mxu0 0.0
        %363 = vmatprep.subr.mxu0 0.0
        %364 = vmatpush1.msra.mxu0 0.0
        %365 = vmatprep.subr.mxu0 0.0
        %366 = vmatpush1.msra.mxu0 0.0
        %367 = vmatprep.subr.mxu0 0.0
        %368 = vmatpush1.msra.mxu0 0.0
        %369 = vmatprep.subr.mxu0 0.0
        %370 = vmatpush1.msra.mxu0 0.0
        %371 = vmatprep.subr.mxu0 0.0
        %372 = vmatpush1.msra.mxu0 0.0
        %373 = vmatprep.subr.mxu0 0.0
        %374 = vmatpush1.msra.mxu0 0.0
        %375 = vmatprep.subr.mxu0 0.0
        %376 = vmatpush1.msra.mxu0 0.0
        %377 = vmatprep.subr.mxu0 0.0
        %378 = vmatpush1.msra.mxu0 0.0
        %379 = vmatprep.subr.mxu0 0.0
        %380 = vmatpush1.msra.mxu0 0.0
        %381 = vmatprep.subr.mxu0 0.0
        %382 = vmatpush1.msra.mxu0 0.0
        %383 = vmatprep.subr.mxu0 0.0
        %384 = vmatpush1.msra.mxu0 0.0
        %385 = vmatprep.subr.mxu0 0.0
        %386 = vmatpush1.msra.mxu0 0.0
        %387 = vmatprep.subr.mxu0 0.0
        %388 = vmatpush1.msra.mxu0 0.0
        %389 = vmatprep.subr.mxu0 0.0
        %390 = vmatpush1.msra.mxu0 0.0
        %391 = vmatprep.subr.mxu0 0.0
        %392 = vmatpush1.msra.mxu0 0.0
        %393 = vmatprep.subr.mxu0 0.0
        %394 = vmatpush1.msra.mxu0 0.0
        %395 = vmatprep.subr.mxu0 0.0
        %396 = vmatpush1.msra.mxu0 0.0
        %397 = vmatprep.subr.mxu0 0.0
        %398 = vmatpush1.msra.mxu0 0.0
        %399 = vmatprep.subr.mxu0 0.0
        %400 = vmatpush1.msra.mxu0 0.0
        %401 = vmatprep.subr.mxu0 0.0
        %402 = vmatpush1.msra.mxu0 0.0
        %403 = vmatprep.subr.mxu0 0.0
        %404 = vmatpush1.msra.mxu0 0.0
        %405 = vmatprep.subr.mxu0 0.0
        %406 = vmatpush1.msra.mxu0 0.0
        %407 = vmatprep.subr.mxu0 0.0
        %408 = vmatpush1.msra.mxu0 0.0
        %409 = vmatprep.subr.mxu0 0.0
        %410 = vmatpush1.msra.mxu0 0.0
        %411 = vmatprep.subr.mxu0 0.0
        %412 = vmatpush1.msra.mxu0 0.0
        %413 = vmatprep.subr.mxu0 0.0
        %414 = vmatpush1.msra.mxu0 0.0
        %415 = vmatprep.subr.mxu0 0.0
        %416 = vmatpush1.msra.mxu0 0.0
        %417 = vmatprep.subr.mxu0 0.0
        %418 = vmatpush1.msra.mxu0 0.0
        %419 = vmatprep.mubr.f32.mxu0 0.0
        %v420 = vand.u32 %v259, 4294901760
        %421 = vmatmul.mubr.f32.gmra.mrb[0].mxu0 %v420
        %v422 = vpop.f32.mrb[0].mxu0
        %v423 = vadd.f32 %v337, %v422
        %v424 = vpop.f32.mrb[0].mxu0
        %425 = vmatprep.mubr.f32.mxu0 0.0
        %v426 = vand.u32 %v262, 4294901760
        %427 = vmatmul.mubr.f32.gmra.mrb[0].mxu0 %v426
        %v428 = vpop.f32.mrb[0].mxu0
        %v429 = vadd.f32 %v347, %v428
        %v430 = vpop.f32.mrb[0].mxu0
        %431 = vdwg.mxu0
        %432 = vmatprep.subr.mxu0 0.0
        %v433 = vand.u32 %v242, 4294901760
        %v434 = vsub.f32 %v242, %v433
        %435 = vmatpush1.msra.mxu0 %v434
        %436 = vmatprep.subr.mxu0 0.0
        %437 = vmatpush1.msra.mxu0 0.0
        %438 = vmatprep.subr.mxu0 0.0
        %439 = vmatpush1.msra.mxu0 0.0
        %440 = vmatprep.subr.mxu0 0.0
        %441 = vmatpush1.msra.mxu0 0.0
        %442 = vmatprep.subr.mxu0 0.0
        %443 = vmatpush1.msra.mxu0 0.0
        %444 = vmatprep.subr.mxu0 0.0
        %445 = vmatpush1.msra.mxu0 0.0
        %446 = vmatprep.subr.mxu0 0.0
        %447 = vmatpush1.msra.mxu0 0.0
        %448 = vmatprep.subr.mxu0 0.0
        %449 = vmatpush1.msra.mxu0 0.0
        %450 = vmatprep.subr.mxu0 0.0
        %451 = vmatpush1.msra.mxu0 0.0
        %452 = vmatprep.subr.mxu0 0.0
        %453 = vmatpush1.msra.mxu0 0.0
        %454 = vmatprep.subr.mxu0 0.0
        %455 = vmatpush1.msra.mxu0 0.0
        %456 = vmatprep.subr.mxu0 0.0
        %457 = vmatpush1.msra.mxu0 0.0
        %458 = vmatprep.subr.mxu0 0.0
        %459 = vmatpush1.msra.mxu0 0.0
        %460 = vmatprep.subr.mxu0 0.0
        %461 = vmatpush1.msra.mxu0 0.0
        %462 = vmatprep.subr.mxu0 0.0
        %463 = vmatpush1.msra.mxu0 0.0
        %464 = vmatprep.subr.mxu0 0.0
        %465 = vmatpush1.msra.mxu0 0.0
        %466 = vmatprep.subr.mxu0 0.0
        %467 = vmatpush1.msra.mxu0 0.0
        %468 = vmatprep.subr.mxu0 0.0
        %469 = vmatpush1.msra.mxu0 0.0
        %470 = vmatprep.subr.mxu0 0.0
        %471 = vmatpush1.msra.mxu0 0.0
        %472 = vmatprep.subr.mxu0 0.0
        %473 = vmatpush1.msra.mxu0 0.0
        %474 = vmatprep.subr.mxu0 0.0
        %475 = vmatpush1.msra.mxu0 0.0
        %476 = vmatprep.subr.mxu0 0.0
        %477 = vmatpush1.msra.mxu0 0.0
        %478 = vmatprep.subr.mxu0 0.0
        %479 = vmatpush1.msra.mxu0 0.0
        %480 = vmatprep.subr.mxu0 0.0
        %481 = vmatpush1.msra.mxu0 0.0
        %482 = vmatprep.subr.mxu0 0.0
        %483 = vmatpush1.msra.mxu0 0.0
        %484 = vmatprep.subr.mxu0 0.0
        %485 = vmatpush1.msra.mxu0 0.0
        %486 = vmatprep.subr.mxu0 0.0
        %487 = vmatpush1.msra.mxu0 0.0
        %488 = vmatprep.subr.mxu0 0.0
        %489 = vmatpush1.msra.mxu0 0.0
        %490 = vmatprep.subr.mxu0 0.0
        %491 = vmatpush1.msra.mxu0 0.0
        %492 = vmatprep.subr.mxu0 0.0
        %493 = vmatpush1.msra.mxu0 0.0
        %494 = vmatprep.subr.mxu0 0.0
        %495 = vmatpush1.msra.mxu0 0.0
        %496 = vmatprep.subr.mxu0 0.0
        %497 = vmatpush1.msra.mxu0 0.0
        %498 = vmatprep.mubr.f32.mxu0 0.0
        %v499 = vand.u32 %v259, 4294901760
        %v500 = vsub.f32 %v259, %v499
        %501 = vmatmul.mubr.f32.gmra.mrb[0].mxu0 %v500
        %v502 = vpop.f32.mrb[0].mxu0
        %v503 = vadd.f32 %v423, %v502
        %v504 = vpop.f32.mrb[0].mxu0
        %505 = vmatprep.mubr.f32.mxu0 0.0
        %v506 = vand.u32 %v262, 4294901760
        %v507 = vsub.f32 %v262, %v506
        %508 = vmatmul.mubr.f32.gmra.mrb[0].mxu0 %v507
        %v509 = vpop.f32.mrb[0].mxu0
        %v510 = vadd.f32 %v429, %v509
        %v511 = vpop.f32.mrb[0].mxu0
        %512 = vdwg.mxu0
        %513 = vmatprep.subr.mxu0 0.0
        %v514 = vand.u32 %v242, 4294901760
        %515 = vmatpush1.msra.mxu0 %v514
        %516 = vmatprep.subr.mxu0 0.0
        %517 = vmatpush1.msra.mxu0 0.0
        %518 = vmatprep.subr.mxu0 0.0
        %519 = vmatpush1.msra.mxu0 0.0
        %520 = vmatprep.subr.mxu0 0.0
        %521 = vmatpush1.msra.mxu0 0.0
        %522 = vmatprep.subr.mxu0 0.0
        %523 = vmatpush1.msra.mxu0 0.0
        %524 = vmatprep.subr.mxu0 0.0
        %525 = vmatpush1.msra.mxu0 0.0
        %526 = vmatprep.subr.mxu0 0.0
        %527 = vmatpush1.msra.mxu0 0.0
        %528 = vmatprep.subr.mxu0 0.0
        %529 = vmatpush1.msra.mxu0 0.0
        %530 = vmatprep.subr.mxu0 0.0
        %531 = vmatpush1.msra.mxu0 0.0
        %532 = vmatprep.subr.mxu0 0.0
        %533 = vmatpush1.msra.mxu0 0.0
        %534 = vmatprep.subr.mxu0 0.0
        %535 = vmatpush1.msra.mxu0 0.0
        %536 = vmatprep.subr.mxu0 0.0
        %537 = vmatpush1.msra.mxu0 0.0
        %538 = vmatprep.subr.mxu0 0.0
        %539 = vmatpush1.msra.mxu0 0.0
        %540 = vmatprep.subr.mxu0 0.0
        %541 = vmatpush1.msra.mxu0 0.0
        %542 = vmatprep.subr.mxu0 0.0
        %543 = vmatpush1.msra.mxu0 0.0
        %544 = vmatprep.subr.mxu0 0.0
        %545 = vmatpush1.msra.mxu0 0.0
        %546 = vmatprep.subr.mxu0 0.0
        %547 = vmatpush1.msra.mxu0 0.0
        %548 = vmatprep.subr.mxu0 0.0
        %549 = vmatpush1.msra.mxu0 0.0
        %550 = vmatprep.subr.mxu0 0.0
        %551 = vmatpush1.msra.mxu0 0.0
        %552 = vmatprep.subr.mxu0 0.0
        %553 = vmatpush1.msra.mxu0 0.0
        %554 = vmatprep.subr.mxu0 0.0
        %555 = vmatpush1.msra.mxu0 0.0
        %556 = vmatprep.subr.mxu0 0.0
        %557 = vmatpush1.msra.mxu0 0.0
        %558 = vmatprep.subr.mxu0 0.0
        %559 = vmatpush1.msra.mxu0 0.0
        %560 = vmatprep.subr.mxu0 0.0
        %561 = vmatpush1.msra.mxu0 0.0
        %562 = vmatprep.subr.mxu0 0.0
        %563 = vmatpush1.msra.mxu0 0.0
        %564 = vmatprep.subr.mxu0 0.0
        %565 = vmatpush1.msra.mxu0 0.0
        %566 = vmatprep.subr.mxu0 0.0
        %567 = vmatpush1.msra.mxu0 0.0
        %568 = vmatprep.subr.mxu0 0.0
        %569 = vmatpush1.msra.mxu0 0.0
        %570 = vmatprep.subr.mxu0 0.0
        %571 = vmatpush1.msra.mxu0 0.0
        %572 = vmatprep.subr.mxu0 0.0
        %573 = vmatpush1.msra.mxu0 0.0
        %574 = vmatprep.subr.mxu0 0.0
        %575 = vmatpush1.msra.mxu0 0.0
        %576 = vmatprep.subr.mxu0 0.0
        %577 = vmatpush1.msra.mxu0 0.0
        %578 = vmatprep.mubr.f32.mxu0 0.0
        %v579 = vand.u32 %v259, 4294901760
        %v580 = vsub.f32 %v259, %v579
        %v581 = vand.u32 %v580, 4294901760
        %582 = vmatmul.mubr.f32.gmra.mrb[0].mxu0 %v581
        %v583 = vpop.f32.mrb[0].mxu0
        %v584 = vadd.f32 %v503, %v583
        %v585 = vpop.f32.mrb[0].mxu0
        %586 = vmatprep.mubr.f32.mxu0 0.0
        %v587 = vand.u32 %v262, 4294901760
        %v588 = vsub.f32 %v262, %v587
        %v589 = vand.u32 %v588, 4294901760
        %590 = vmatmul.mubr.f32.gmra.mrb[0].mxu0 %v589
        %v591 = vpop.f32.mrb[0].mxu0
        %v592 = vadd.f32 %v510, %v591
        %v593 = vpop.f32.mrb[0].mxu0
        %594 = vdwg.mxu0
        %595 = vmatprep.subr.mxu0 0.0
        %v596 = vand.u32 %v242, 4294901760
        %v597 = vsub.f32 %v242, %v596
        %v598 = vand.u32 %v597, 4294901760
        %599 = vmatpush1.msra.mxu0 %v598
        %600 = vmatprep.subr.mxu0 0.0
        %601 = vmatpush1.msra.mxu0 0.0
        %602 = vmatprep.subr.mxu0 0.0
        %603 = vmatpush1.msra.mxu0 0.0
        %604 = vmatprep.subr.mxu0 0.0
        %605 = vmatpush1.msra.mxu0 0.0
        %606 = vmatprep.subr.mxu0 0.0
        %607 = vmatpush1.msra.mxu0 0.0
        %608 = vmatprep.subr.mxu0 0.0
        %609 = vmatpush1.msra.mxu0 0.0
        %610 = vmatprep.subr.mxu0 0.0
        %611 = vmatpush1.msra.mxu0 0.0
        %612 = vmatprep.subr.mxu0 0.0
        %613 = vmatpush1.msra.mxu0 0.0
        %614 = vmatprep.subr.mxu0 0.0
        %615 = vmatpush1.msra.mxu0 0.0
        %616 = vmatprep.subr.mxu0 0.0
        %617 = vmatpush1.msra.mxu0 0.0
        %618 = vmatprep.subr.mxu0 0.0
        %619 = vmatpush1.msra.mxu0 0.0
        %620 = vmatprep.subr.mxu0 0.0
        %621 = vmatpush1.msra.mxu0 0.0
        %622 = vmatprep.subr.mxu0 0.0
        %623 = vmatpush1.msra.mxu0 0.0
        %624 = vmatprep.subr.mxu0 0.0
        %625 = vmatpush1.msra.mxu0 0.0
        %626 = vmatprep.subr.mxu0 0.0
        %627 = vmatpush1.msra.mxu0 0.0
        %628 = vmatprep.subr.mxu0 0.0
        %629 = vmatpush1.msra.mxu0 0.0
        %630 = vmatprep.subr.mxu0 0.0
        %631 = vmatpush1.msra.mxu0 0.0
        %632 = vmatprep.subr.mxu0 0.0
        %633 = vmatpush1.msra.mxu0 0.0
        %634 = vmatprep.subr.mxu0 0.0
        %635 = vmatpush1.msra.mxu0 0.0
        %636 = vmatprep.subr.mxu0 0.0
        %637 = vmatpush1.msra.mxu0 0.0
        %638 = vmatprep.subr.mxu0 0.0
        %639 = vmatpush1.msra.mxu0 0.0
        %640 = vmatprep.subr.mxu0 0.0
        %641 = vmatpush1.msra.mxu0 0.0
        %642 = vmatprep.subr.mxu0 0.0
        %643 = vmatpush1.msra.mxu0 0.0
        %644 = vmatprep.subr.mxu0 0.0
        %645 = vmatpush1.msra.mxu0 0.0
        %646 = vmatprep.subr.mxu0 0.0
        %647 = vmatpush1.msra.mxu0 0.0
        %648 = vmatprep.subr.mxu0 0.0
        %649 = vmatpush1.msra.mxu0 0.0
        %650 = vmatprep.subr.mxu0 0.0
        %651 = vmatpush1.msra.mxu0 0.0
        %652 = vmatprep.subr.mxu0 0.0
        %653 = vmatpush1.msra.mxu0 0.0
        %654 = vmatprep.subr.mxu0 0.0
        %655 = vmatpush1.msra.mxu0 0.0
        %656 = vmatprep.subr.mxu0 0.0
        %657 = vmatpush1.msra.mxu0 0.0
        %658 = vmatprep.subr.mxu0 0.0
        %659 = vmatpush1.msra.mxu0 0.0
        %660 = vmatprep.subr.mxu0 0.0
        %661 = vmatpush1.msra.mxu0 0.0
        %662 = vmatprep.mubr.f32.mxu0 0.0
        %v663 = vand.u32 %v259, 4294901760
        %664 = vmatmul.mubr.f32.gmra.mrb[0].mxu0 %v663
        %v665 = vpop.f32.mrb[0].mxu0
        %v666 = vadd.f32 %v584, %v665
        %v667 = vpop.f32.mrb[0].mxu0
        %668 = vmatprep.mubr.f32.mxu0 0.0
        %v669 = vand.u32 %v262, 4294901760
        %670 = vmatmul.mubr.f32.gmra.mrb[0].mxu0 %v669
        %v671 = vpop.f32.mrb[0].mxu0
        %v672 = vadd.f32 %v592, %v671
        %v673 = vpop.f32.mrb[0].mxu0
        %674 = vdwg.mxu0
        %675 = vmatprep.subr.mxu0 0.0
        %v676 = vand.u32 %v242, 4294901760
        %677 = vmatpush1.msra.mxu0 %v676
        %678 = vmatprep.subr.mxu0 0.0
        %679 = vmatpush1.msra.mxu0 0.0
        %680 = vmatprep.subr.mxu0 0.0
        %681 = vmatpush1.msra.mxu0 0.0
        %682 = vmatprep.subr.mxu0 0.0
        %683 = vmatpush1.msra.mxu0 0.0
        %684 = vmatprep.subr.mxu0 0.0
        %685 = vmatpush1.msra.mxu0 0.0
        %686 = vmatprep.subr.mxu0 0.0
        %687 = vmatpush1.msra.mxu0 0.0
        %688 = vmatprep.subr.mxu0 0.0
        %689 = vmatpush1.msra.mxu0 0.0
        %690 = vmatprep.subr.mxu0 0.0
        %691 = vmatpush1.msra.mxu0 0.0
        %692 = vmatprep.subr.mxu0 0.0
        %693 = vmatpush1.msra.mxu0 0.0
        %694 = vmatprep.subr.mxu0 0.0
        %695 = vmatpush1.msra.mxu0 0.0
        %696 = vmatprep.subr.mxu0 0.0
        %697 = vmatpush1.msra.mxu0 0.0
        %698 = vmatprep.subr.mxu0 0.0
        %699 = vmatpush1.msra.mxu0 0.0
        %700 = vmatprep.subr.mxu0 0.0
        %701 = vmatpush1.msra.mxu0 0.0
        %702 = vmatprep.subr.mxu0 0.0
        %703 = vmatpush1.msra.mxu0 0.0
        %704 = vmatprep.subr.mxu0 0.0
        %705 = vmatpush1.msra.mxu0 0.0
        %706 = vmatprep.subr.mxu0 0.0
        %707 = vmatpush1.msra.mxu0 0.0
        %708 = vmatprep.subr.mxu0 0.0
        %709 = vmatpush1.msra.mxu0 0.0
        %710 = vmatprep.subr.mxu0 0.0
        %711 = vmatpush1.msra.mxu0 0.0
        %712 = vmatprep.subr.mxu0 0.0
        %713 = vmatpush1.msra.mxu0 0.0
        %714 = vmatprep.subr.mxu0 0.0
        %715 = vmatpush1.msra.mxu0 0.0
        %716 = vmatprep.subr.mxu0 0.0
        %717 = vmatpush1.msra.mxu0 0.0
        %718 = vmatprep.subr.mxu0 0.0
        %719 = vmatpush1.msra.mxu0 0.0
        %720 = vmatprep.subr.mxu0 0.0
        %721 = vmatpush1.msra.mxu0 0.0
        %722 = vmatprep.subr.mxu0 0.0
        %723 = vmatpush1.msra.mxu0 0.0
        %724 = vmatprep.subr.mxu0 0.0
        %725 = vmatpush1.msra.mxu0 0.0
        %726 = vmatprep.subr.mxu0 0.0
        %727 = vmatpush1.msra.mxu0 0.0
        %728 = vmatprep.subr.mxu0 0.0
        %729 = vmatpush1.msra.mxu0 0.0
        %730 = vmatprep.subr.mxu0 0.0
        %731 = vmatpush1.msra.mxu0 0.0
        %732 = vmatprep.subr.mxu0 0.0
        %733 = vmatpush1.msra.mxu0 0.0
        %734 = vmatprep.subr.mxu0 0.0
        %735 = vmatpush1.msra.mxu0 0.0
        %736 = vmatprep.subr.mxu0 0.0
        %737 = vmatpush1.msra.mxu0 0.0
        %738 = vmatprep.subr.mxu0 0.0
        %739 = vmatpush1.msra.mxu0 0.0
        %740 = vmatprep.mubr.f32.mxu0 0.0
        %v741 = vand.u32 %v259, 4294901760
        %742 = vmatmul.mubr.f32.gmra.mrb[0].mxu0 %v741
        %v743 = vpop.f32.mrb[0].mxu0
        %v744 = vadd.f32 %v666, %v743
        %v745 = vpop.f32.mrb[0].mxu0
        %746 = vmatprep.mubr.f32.mxu0 0.0
        %v747 = vand.u32 %v262, 4294901760
        %748 = vmatmul.mubr.f32.gmra.mrb[0].mxu0 %v747
        %v749 = vpop.f32.mrb[0].mxu0
        %v750 = vadd.f32 %v672, %v749
        %v751 = vpop.f32.mrb[0].mxu0
        %752 = vdwg.mxu0
        %753 = vxpose.xlu0.b32.start [1/16] %v744, 128
        %754 = vxpose.xlu0.b32.cont [2/16] %v750, 128
        %755 = vxpose.xlu0.b32.cont [3/16] 0.0, 128
        %756 = vxpose.xlu0.b32.cont [4/16] 0.0, 128
        %757 = vxpose.xlu0.b32.cont [5/16] 0.0, 128
        %758 = vxpose.xlu0.b32.cont [6/16] 0.0, 128
        %759 = vxpose.xlu0.b32.cont [7/16] 0.0, 128
        %760 = vxpose.xlu0.b32.cont [8/16] 0.0, 128
        %761 = vxpose.xlu0.b32.cont [9/16] 0.0, 128
        %762 = vxpose.xlu0.b32.cont [10/16] 0.0, 128
        %763 = vxpose.xlu0.b32.cont [11/16] 0.0, 128
        %764 = vxpose.xlu0.b32.cont [12/16] 0.0, 128
        %765 = vxpose.xlu0.b32.cont [13/16] 0.0, 128
        %766 = vxpose.xlu0.b32.cont [14/16] 0.0, 128
        %767 = vxpose.xlu0.b32.cont [15/16] 0.0, 128
        %768 = vxpose.xlu0.b32.end [16/16] 0.0, 128
        %v769 = vpop.trf.xlu0
        %v770 = vpop.trf.xlu0
        %v771 = vpop.trf.xlu0
        %v772 = vpop.trf.xlu0
        %v773 = vpop.trf.xlu0
        %v774 = vpop.trf.xlu0
        %v775 = vpop.trf.xlu0
        %v776 = vpop.trf.xlu0
        %v777 = vpop.trf.xlu0
        %v778 = vpop.trf.xlu0
        %v779 = vpop.trf.xlu0
        %v780 = vpop.trf.xlu0
        %v781 = vpop.trf.xlu0
        %v782 = vpop.trf.xlu0
        %v783 = vpop.trf.xlu0
        %v784 = vpop.trf.xlu0
        %vm785 = vcmask 130048
        %786 = vst.msk [vmem:[%s241] sm:$0xff] %vm785, %v769
        %787 = vst.msk [vmem:[%s241 + $0x8] sm:$0xff] %vm785, %v770
        %788 = vst.msk [vmem:[%s241 + $0x10] sm:$0xff] %vm785, %v771
        %789 = vst.msk [vmem:[%s241 + $0x18] sm:$0xff] %vm785, %v772
        %790 = vst.msk [vmem:[%s241 + $0x20] sm:$0xff] %vm785, %v773
        %791 = vst.msk [vmem:[%s241 + $0x28] sm:$0xff] %vm785, %v774
        %792 = vst.msk [vmem:[%s241 + $0x30] sm:$0xff] %vm785, %v775
        %793 = vst.msk [vmem:[%s241 + $0x38] sm:$0xff] %vm785, %v776
        %vm794 = vcmask 523264
        %v795 = vsel %vm794, %v744, -inf
        %796 = vmax.xlane.f32.xlu0 %v795
        %v797 = vpop.xlane.xlu0 %796
        %v798 = vsel %vm794, %v750, -inf
        %799 = vmax.xlane.f32.xlu0 %v798
        %v800 = vpop.xlane.xlu0 %799
        %v801 = vmax.f32 %v797, %v800
        %v802 = vrot.slane %v801, 4
        %v803 = vmax.f32 %v801, %v802
        %v804 = vrot.slane %v803, 2
        %v805 = vmax.f32 %v803, %v804
        %v806 = vrot.slane %v805, 1
        %v807 = vmax.f32 %v805, %v806
        %v808 = vsub.f32 %v744, %v807
        %v809 = vsub.f32 %v750, %v807
        %v810 = vmul.f32 %v808, 1.442695
        %v811 = vpow.pop %v810
        %v812 = vmul.f32 %v809, 1.442695
        %v813 = vpow.pop %v812
        %v814 = vsel %vm794, %v811, 0.0
        %v815 = vsel %vm794, %v813, 0.0
        %v816 = vadd.f32 %v814, %v815
        %v817 = vrot.slane %v816, 4
        %v818 = vadd.f32 %v816, %v817
        %v819 = vrot.slane %v818, 2
        %v820 = vadd.f32 %v818, %v819
        %v821 = vrot.slane %v820, 1
        %v822 = vadd.f32 %v820, %v821
        %v823 = vsel %vm794, %v822, 0.0
        %824 = vadd.xlane.f32.xlu0 %v823
        %v825 = vpop.xlane.xlu0 %824
        %v826 = vrcp.pop %v825
        %v827 = vmul.f32 %v822, %v826
        %vm828 = vcmask 516096
        %829 = vst.msk [vmem:[%s225] sm:$0x1] %vm828, %v827
        %v830 = vmul.f32 %v827, 64.0
        %v831 = vmul.f32 %v242, %v830
        %832 = vst.msk [vmem:[%s232] sm:$0xff] %vm794, %v831
        %p833 = scmp.lt.s32.totalorder %s23, 1
        %s834 = scalar_select %p833, %s23, 1
        %s835 = smul.addr %s834, 8
        %s836 = smul.addr %s835, 8
        %s837 = scalar_lea.vmem %s3, %s836
        %s838 = sand.u32 %s125, 1
        %s839 = scalar_lea.sflag [#allocation3], %s838
        %s840 = sand.u32 %s125, 1
        %s841 = scalar_lea.vmem [#allocation2], %s840
        %s842 = sand.u32 %s151, 1
        %s843 = scalar_lea.sflag [#allocation5], %s842
        %s844 = sand.u32 %s151, 1
        %s845 = smul.addr %s844, 8
        %s846 = scalar_lea.vmem [#allocation4], %s845
        // Predicated region
        $region33: #{tpu_custom_call.1} parent=31 // pred_check
          %p847 = pneg %p109
        $region34: #{tpu_custom_call.1} parent=31 // pred_check_branch
          %849 = sbr.rel (%p847) target = $region36
        $region35: #{tpu_custom_call.1} parent=31 // pred_region
          _
        $region36: #{tpu_custom_call.1} parent=31 // pred_fallthru
          _
        // Predicated region
        $region37: #{tpu_custom_call.1} parent=31 // pred_check
          %p850 = pneg %p135
        $region38: #{tpu_custom_call.1} parent=31 // pred_check_branch
          %852 = sbr.rel (%p850) target = $region40
        $region39: #{tpu_custom_call.1} parent=31 // pred_region
          %s854 = ssub.s32 16, 16
          %855 = vsyncadd %s839, %s854
          %s856 = smul.addr %s23, 16
          %s857 = scalar_lea.hbm %s4, %s856
          %s859 = sshll.u32 %s841, 4
          %s860 = int_to_ptr.vmem [resolvable:$true] %s859
          %862 = dma.vmem_to_hbm [thread:$0]  %s860, 16, %s857, %s839
        $region40: #{tpu_custom_call.1} parent=31 // pred_fallthru
          _
        // Predicated region
        $region41: #{tpu_custom_call.1} parent=31 // pred_check
          %p863 = pneg %p161
        $region42: #{tpu_custom_call.1} parent=31 // pred_check_branch
          %865 = sbr.rel (%p863) target = $region44
        $region43: #{tpu_custom_call.1} parent=31 // pred_region
          %s867 = ssub.s32 128, 128
          %868 = vsyncadd %s843, %s867
          %s869 = smul.addr %s23, 128
          %s870 = scalar_lea.hbm %s5, %s869
          %s872 = sshll.u32 %s846, 4
          %s873 = int_to_ptr.vmem [resolvable:$true] %s872
          %875 = dma.vmem_to_hbm [thread:$0]  %s873, 128, %s870, %s843
        $region44: #{tpu_custom_call.1} parent=31 // pred_fallthru
          _
      $region32: #{tpu_custom_call.1} parent=5 // pred_fallthru
        _
      %p876 = scmp.le.s32.totalorder 2, %s18
      // Predicated region
      $region45: #{tpu_custom_call.1} parent=5 // pred_check
        %p877 = pneg %p876
      $region46: #{tpu_custom_call.1} parent=5 // pred_check_branch
        %879 = sbr.rel (%p877) target = $region48
      $region47: #{tpu_custom_call.1} parent=5 // pred_region
        %s880 = ssub.s32 %s18, 2
        // Predicated region
        $region49: #{tpu_custom_call.1} parent=47 // pred_check
          %p881 = pneg %p115
        $region50: #{tpu_custom_call.1} parent=47 // pred_check_branch
          %883 = sbr.rel (%p881) target = $region52
        $region51: #{tpu_custom_call.1} parent=47 // pred_region
          %p884 = scmp.lt.s32.totalorder %s24, 1
          %s885 = scalar_select %p884, %s24, 1
          %s886 = smul.addr %s885, 8
          %s887 = smul.addr %s886, 8
          %s888 = scalar_lea.vmem %s3, %s887
        $region52: #{tpu_custom_call.1} parent=47 // pred_fallthru
          _
        // Predicated region
        $region53: #{tpu_custom_call.1} parent=47 // pred_check
          %p889 = pneg %p141
        $region54: #{tpu_custom_call.1} parent=47 // pred_check_branch
          %891 = sbr.rel (%p889) target = $region56
        $region55: #{tpu_custom_call.1} parent=47 // pred_region
          %s892 = sand.u32 %s126, 1
          %s893 = scalar_lea.sflag [#allocation3], %s892
          %s894 = sand.u32 %s126, 1
          %s895 = scalar_lea.vmem [#allocation2], %s894
          %896 = dma.done %s893, 16
        $region56: #{tpu_custom_call.1} parent=47 // pred_fallthru
          _
        // Predicated region
        $region57: #{tpu_custom_call.1} parent=47 // pred_check
          %p897 = pneg %p167
        $region58: #{tpu_custom_call.1} parent=47 // pred_check_branch
          %899 = sbr.rel (%p897) target = $region60
        $region59: #{tpu_custom_call.1} parent=47 // pred_region
          %s900 = sand.u32 %s152, 1
          %s901 = scalar_lea.sflag [#allocation5], %s900
          %s902 = sand.u32 %s152, 1
          %s903 = smul.addr %s902, 8
          %s904 = scalar_lea.vmem [#allocation4], %s903
          %905 = dma.done %s901, 128
        $region60: #{tpu_custom_call.1} parent=47 // pred_fallthru
          _
      $region48: #{tpu_custom_call.1} parent=5 // pred_fallthru
        _
    $region6: #{tpu_custom_call.1} parent=1 // loop_footer
      %s22 = sadd.s32 1, %s18
    $region7: #{tpu_custom_call.1} parent=1 // loop_footer_branch
      %17 = sbr.rel target = $region3
    $region8: #{tpu_custom_call.1} parent=1 // loop_exit
      _
    %906 = vsyncpa [#allocation3], 1
    %s907 = scalar_lea.sflag [#allocation3], 1
    %908 = vsyncpa %s907, 1
    %909 = vsyncpa [#allocation5], 1
    %s910 = scalar_lea.sflag [#allocation5], 1
    %911 = vsyncpa %s910, 1

</llo_original>
